<compile_context>
chip_gen: v7x
topology: tpu7x:2x2x1
jax: 0.10.0
libtpu: 0.0.40
codegen_flags: <defaults>
</compile_context>

<pallas_src>
import jax
import jax.numpy as jnp
from jax import lax
from jax.experimental import pallas as pl
from jax.experimental.pallas import tpu as pltpu


def _make_warp_kernel(C, H, W):
    HW = H * W

    def warp_kernel(x_l_ref, flo_l_ref, mask_l_ref,
                    x_r_ref, flo_r_ref, mask_r_ref,
                    grid_ref, out_ref):
        # Ref layouts (channel-major):
        #   x_*   : (C*H, W)  image rows stacked per channel
        #   flo_* : (2, HW)   row0 = dx, row1 = dy
        #   mask_*: (1, HW)
        #   grid  : (2, HW)   row0 = x coord, row1 = y coord
        #   out   : (C, HW)
        g = grid_ref[...]                                         # (2, HW)
        col_ids = lax.broadcasted_iota(jnp.int32, (W, HW), 0)     # source x idx
        row_ids = lax.broadcasted_iota(jnp.int32, (H, HW), 0)     # source y idx

        def warp_half(x_ref, flo_ref, mask_ref):
            f = flo_ref[...]                                      # (2, HW)
            px = jnp.clip(g[0:1, :] + f[0:1, :], 0.0, float(W - 1))  # (1, HW)
            py = jnp.clip(g[1:2, :] + f[1:2, :], 0.0, float(H - 1))  # (1, HW)
            x0 = jnp.floor(px)
            y0 = jnp.floor(py)
            x1 = jnp.minimum(x0 + 1.0, float(W - 1))
            y1 = jnp.minimum(y0 + 1.0, float(H - 1))
            wx = px - x0
            wy = py - y0
            x0i = x0.astype(jnp.int32)
            x1i = x1.astype(jnp.int32)
            y0i = y0.astype(jnp.int32)
            y1i = y1.astype(jnp.int32)

            # Separable one-hot interpolation weights (no dense (HW,HW) matrix).
            cxt = (jnp.where(col_ids == x0i, 1.0 - wx, 0.0) +
                   jnp.where(col_ids == x1i, wx, 0.0))            # (W, HW)
            # Fold 0.5 * mask into the row weights -> no per-pixel epilogue.
            m = mask_ref[...]                                     # (1, HW)
            ryt = (jnp.where(row_ids == y0i, 1.0 - wy, 0.0) +
                   jnp.where(row_ids == y1i, wy, 0.0)) * (0.5 * m)    # (H, HW)

            # Horizontal pass on the MXU: (C*H, W) @ (W, HW) -> (C*H, HW)
            t = jnp.dot(x_ref[...], cxt, preferred_element_type=jnp.float32)

            # Vertical pass: weight per query, reduce over the H source rows.
            rows = []
            for c in range(C):                                    # C is tiny/static
                tc = t[c * H:(c + 1) * H, :]                      # (H, HW)
                rows.append(jnp.sum(tc * ryt, axis=0, keepdims=True))
            return jnp.concatenate(rows, axis=0)                  # (C, HW)

        fir_l = warp_half(x_l_ref, flo_l_ref, mask_l_ref)   # already * 0.5 * mask
        fir_r = warp_half(x_r_ref, flo_r_ref, mask_r_ref)
        out_ref[...] = (fir_l + fir_r).astype(out_ref.dtype)

    return warp_kernel


def model_train_predict_forward(x_l, flo_l, mask_l, x_r, flo_r, mask_r,
                                grid_up, grid_org):
    """Mirrors Model_train_predict.forward. Returns (predict1, predict1, predict1)."""
    N, C, H, W = x_l.shape
    HW = H * W

    # Free reshapes only (NCHW is contiguous): no transposes outside the kernel.
    x_l_r = x_l.reshape(N, C * H, W)
    x_r_r = x_r.reshape(N, C * H, W)
    flo_l_r = flo_l.reshape(N, 2, HW)
    flo_r_r = flo_r.reshape(N, 2, HW)
    mask_l_r = mask_l.reshape(N, 1, HW)
    mask_r_r = mask_r.reshape(N, 1, HW)
    grid_r = grid_org.reshape(N, 2, HW)   # grid_up unused (see TODO above)

    kernel = _make_warp_kernel(C, H, W)

    def spec(d0, d1):
        return pl.BlockSpec((None, d0, d1), lambda b: (b, 0, 0))

    out_flat = pl.pallas_call(
        kernel,
        out_shape=jax.ShapeDtypeStruct((N, C, HW), jnp.float32),
        grid_spec=pltpu.PrefetchScalarGridSpec(
            num_scalar_prefetch=0,
            grid=(N,),
            in_specs=[spec(C * H, W), spec(2, HW), spec(1, HW),
                      spec(C * H, W), spec(2, HW), spec(1, HW),
                      spec(2, HW)],
            out_specs=spec(C, HW),
        ),
        compiler_params=pltpu.CompilerParams(
            dimension_semantics=("parallel",)),
    )(x_l_r, flo_l_r, mask_l_r, x_r_r, flo_r_r, mask_r_r, grid_r)

    predict1 = out_flat.reshape(N, C, H, W)
    conv3 = 0  # as in the PyTorch forward (a Python int, not a conv output)
    return predict1, predict1, predict1 + conv3


# ---- unused parameters (declared in __init__ but never used in forward) ----
def _init_unused_params(internal_channel=64, resblock_num=1, seed=0):
    key = jax.random.PRNGKey(seed)
    ks = jax.random.split(key, 3 + 2 * resblock_num)
    params = {
        "conv1_w": jax.random.normal(ks[0], (internal_channel, 3, 3, 3)) * 0.02,
        "conv2_w": jax.random.normal(ks[1], (internal_channel, internal_channel, 3, 3)) * 0.02,
        "conv3_w": jax.random.normal(ks[2], (1, internal_channel, 3, 3)) * 0.02,
    }
    for i in range(resblock_num):
        params[f"res{i}_conv1_w"] = jax.random.normal(
            ks[3 + 2 * i], (internal_channel, internal_channel, 3, 3)) * 0.02
        params[f"res{i}_conv2_w"] = jax.random.normal(
            ks[4 + 2 * i], (internal_channel, internal_channel, 3, 3)) * 0.02
    return params


# ---------------- pure-JAX reference for sanity checking --------------------
def _ref_forward(x_l, flo_l, mask_l, x_r, flo_r, mask_r, grid_org):
    N, C, H, W = x_l.shape
    HW = H * W

    def to_flat(t):   # (N, c, H, W) -> (N, HW, c)
        return jnp.transpose(t.reshape(N, t.shape[1], HW), (0, 2, 1))

    def warp_one(x, flo, mask):
        xf = to_flat(x)
        ff = to_flat(flo)
        mf = to_flat(mask)
        gf = to_flat(grid_org)
        px = jnp.clip(gf[..., 0] + ff[..., 0], 0.0, W - 1.0)
        py = jnp.clip(gf[..., 1] + ff[..., 1], 0.0, H - 1.0)
        x0 = jnp.floor(px); y0 = jnp.floor(py)
        x1 = jnp.minimum(x0 + 1.0, W - 1.0)
        y1 = jnp.minimum(y0 + 1.0, H - 1.0)
        wx = px - x0; wy = py - y0
        x0i = x0.astype(jnp.int32); x1i = x1.astype(jnp.int32)
        y0i = y0.astype(jnp.int32); y1i = y1.astype(jnp.int32)

        def gather(iy, ix):
            idx = iy * W + ix
            idx3 = jnp.broadcast_to(idx[:, :, None], (N, HW, C))
            return jnp.take_along_axis(xf, idx3, axis=1)

        out = (gather(y0i, x0i) * ((1 - wx) * (1 - wy))[..., None] +
               gather(y0i, x1i) * (wx * (1 - wy))[..., None] +
               gather(y1i, x0i) * ((1 - wx) * wy)[..., None] +
               gather(y1i, x1i) * (wx * wy)[..., None])
        return out * mf

    fir_L = warp_one(x_l, flo_l, mask_l)
    fir_R = warp_one(x_r, flo_r, mask_r)
    pred = jnp.transpose((fir_L + fir_R) * 0.5, (0, 2, 1)).reshape(N, C, H, W)
    return pred


if __name__ == "__main__":
    N, C, H, W = 2, 3, 16, 16
    key = jax.random.PRNGKey(0)
    k = jax.random.split(key, 7)

    x_l = jax.random.uniform(k[0], (N, C, H, W), jnp.float32)
    x_r = jax.random.uniform(k[1], (N, C, H, W), jnp.float32)
    flo_l = jax.random.uniform(k[2], (N, 2, H, W), jnp.float32, -2.0, 2.0)
    flo_r = jax.random.uniform(k[3], (N, 2, H, W), jnp.float32, -2.0, 2.0)
    mask_l = jax.random.uniform(k[4], (N, 1, H, W), jnp.float32)
    mask_r = jax.random.uniform(k[5], (N, 1, H, W), jnp.float32)

    # pixel-coordinate sampling grid (x along width, y along height)
    ys, xs = jnp.meshgrid(jnp.arange(H, dtype=jnp.float32),
                          jnp.arange(W, dtype=jnp.float32), indexing="ij")
    grid_org = jnp.broadcast_to(jnp.stack([xs, ys], axis=0)[None], (N, 2, H, W))
    grid_up = grid_org  # unused in forward

    _ = _init_unused_params()  # declared-but-unused conv weights

    p1, p2, p3 = model_train_predict_forward(
        x_l, flo_l, mask_l, x_r, flo_r, mask_r, grid_up, grid_org)
    jax.block_until_ready((p1, p2, p3))

    ref = _ref_forward(x_l, flo_l, mask_l, x_r, flo_r, mask_r, grid_org)
    assert p1.shape == (N, C, H, W)
    assert jnp.allclose(p1, ref, atol=1e-4, rtol=1e-4)
    assert jnp.allclose(p3, p1)

    print("KERNEL_OK")
</pallas_src>

<mosaic_0001>
module attributes {stable_mosaic.version = 11 : i64} {
  func.func @warp_kernel(%arg0: i32, %arg1: memref<1x48x16xf32, #tpu.memory_space<vmem>>, %arg2: memref<1x2x256xf32, #tpu.memory_space<vmem>>, %arg3: memref<1x1x256xf32, #tpu.memory_space<vmem>>, %arg4: memref<1x48x16xf32, #tpu.memory_space<vmem>>, %arg5: memref<1x2x256xf32, #tpu.memory_space<vmem>>, %arg6: memref<1x1x256xf32, #tpu.memory_space<vmem>>, %arg7: memref<1x2x256xf32, #tpu.memory_space<vmem>>, %arg8: memref<1x3x256xf32, #tpu.memory_space<vmem>>) attributes {dimension_semantics = [#tpu.dimension_semantics<parallel>], iteration_bounds = array<i64: 2>, scalar_prefetch = 0 : i64, scratch_operands = 0 : i64, tpu.core_type = #tpu.core_type<tc>, window_params = [{transform_indices = @transform_0, window_bounds = array<i64: 1, 48, 16>}, {transform_indices = @transform_1, window_bounds = array<i64: 1, 2, 256>}, {transform_indices = @transform_2, window_bounds = array<i64: 1, 1, 256>}, {transform_indices = @transform_3, window_bounds = array<i64: 1, 48, 16>}, {transform_indices = @transform_4, window_bounds = array<i64: 1, 2, 256>}, {transform_indices = @transform_5, window_bounds = array<i64: 1, 1, 256>}, {transform_indices = @transform_6, window_bounds = array<i64: 1, 2, 256>}, {transform_indices = @transform_7, window_bounds = array<i64: 1, 3, 256>}]} {
    %c0 = arith.constant 0 : index
    %c0_0 = arith.constant 0 : index
    %c0_1 = arith.constant 0 : index
    %0 = vector.load %arg7[%c0, %c0_0, %c0_1] : memref<1x2x256xf32, #tpu.memory_space<vmem>>, vector<1x2x256xf32>
    %1 = vector.shape_cast %0 : vector<1x2x256xf32> to vector<2x256xf32>
    %2 = tpu.iota {dimensions = array<i32: 0>} : vector<16x256xi32>
    %3 = tpu.iota {dimensions = array<i32: 0>} : vector<16x256xi32>
    %c0_2 = arith.constant 0 : index
    %c0_3 = arith.constant 0 : index
    %c0_4 = arith.constant 0 : index
    %4 = vector.load %arg2[%c0_2, %c0_3, %c0_4] : memref<1x2x256xf32, #tpu.memory_space<vmem>>, vector<1x2x256xf32>
    %5 = vector.shape_cast %4 : vector<1x2x256xf32> to vector<2x256xf32>
    %6 = vector.extract_strided_slice %1 {offsets = [0, 0], sizes = [1, 256], strides = [1, 1]} : vector<2x256xf32> to vector<1x256xf32>
    %7 = vector.extract_strided_slice %5 {offsets = [0, 0], sizes = [1, 256], strides = [1, 1]} : vector<2x256xf32> to vector<1x256xf32>
    %8 = arith.addf %6, %7 : vector<1x256xf32>
    %cst = arith.constant 0.000000e+00 : f32
    %cst_5 = arith.constant 1.500000e+01 : f32
    %9 = vector.broadcast %cst : f32 to vector<1x256xf32>
    %10 = arith.maximumf %9, %8 : vector<1x256xf32>
    %11 = vector.broadcast %cst_5 : f32 to vector<1x256xf32>
    %12 = arith.minimumf %11, %10 : vector<1x256xf32>
    %13 = vector.extract_strided_slice %1 {offsets = [1, 0], sizes = [1, 256], strides = [1, 1]} : vector<2x256xf32> to vector<1x256xf32>
    %14 = vector.extract_strided_slice %5 {offsets = [1, 0], sizes = [1, 256], strides = [1, 1]} : vector<2x256xf32> to vector<1x256xf32>
    %15 = arith.addf %13, %14 : vector<1x256xf32>
    %cst_6 = arith.constant 0.000000e+00 : f32
    %cst_7 = arith.constant 1.500000e+01 : f32
    %16 = vector.broadcast %cst_6 : f32 to vector<1x256xf32>
    %17 = arith.maximumf %16, %15 : vector<1x256xf32>
    %18 = vector.broadcast %cst_7 : f32 to vector<1x256xf32>
    %19 = arith.minimumf %18, %17 : vector<1x256xf32>
    %20 = math.floor %12 : vector<1x256xf32>
    %21 = math.floor %19 : vector<1x256xf32>
    %cst_8 = arith.constant 1.000000e+00 : f32
    %22 = vector.broadcast %cst_8 : f32 to vector<1x256xf32>
    %23 = arith.addf %20, %22 : vector<1x256xf32>
    %cst_9 = arith.constant 1.500000e+01 : f32
    %24 = vector.broadcast %cst_9 : f32 to vector<1x256xf32>
    %25 = arith.minimumf %23, %24 : vector<1x256xf32>
    %cst_10 = arith.constant 1.000000e+00 : f32
    %26 = vector.broadcast %cst_10 : f32 to vector<1x256xf32>
    %27 = arith.addf %21, %26 : vector<1x256xf32>
    %cst_11 = arith.constant 1.500000e+01 : f32
    %28 = vector.broadcast %cst_11 : f32 to vector<1x256xf32>
    %29 = arith.minimumf %27, %28 : vector<1x256xf32>
    %30 = arith.subf %12, %20 : vector<1x256xf32>
    %31 = arith.subf %19, %21 : vector<1x256xf32>
    %32 = arith.fptosi %20 : vector<1x256xf32> to vector<1x256xi32>
    %33 = arith.fptosi %25 : vector<1x256xf32> to vector<1x256xi32>
    %34 = arith.fptosi %21 : vector<1x256xf32> to vector<1x256xi32>
    %35 = arith.fptosi %29 : vector<1x256xf32> to vector<1x256xi32>
    %36 = vector.broadcast %32 : vector<1x256xi32> to vector<16x256xi32>
    %37 = arith.cmpi eq, %2, %36 : vector<16x256xi32>
    %cst_12 = arith.constant 1.000000e+00 : f32
    %38 = vector.broadcast %cst_12 : f32 to vector<1x256xf32>
    %39 = arith.subf %38, %30 : vector<1x256xf32>
    %cst_13 = arith.constant 0.000000e+00 : f32
    %40 = vector.shape_cast %39 : vector<1x256xf32> to vector<1x256xf32>
    %41 = vector.broadcast %40 : vector<1x256xf32> to vector<16x256xf32>
    %42 = vector.broadcast %cst_13 : f32 to vector<16x256xf32>
    %43 = arith.select %37, %41, %42 : vector<16x256xi1>, vector<16x256xf32>
    %44 = vector.broadcast %33 : vector<1x256xi32> to vector<16x256xi32>
    %45 = arith.cmpi eq, %2, %44 : vector<16x256xi32>
    %cst_14 = arith.constant 0.000000e+00 : f32
    %46 = vector.shape_cast %30 : vector<1x256xf32> to vector<1x256xf32>
    %47 = vector.broadcast %46 : vector<1x256xf32> to vector<16x256xf32>
    %48 = vector.broadcast %cst_14 : f32 to vector<16x256xf32>
    %49 = arith.select %45, %47, %48 : vector<16x256xi1>, vector<16x256xf32>
    %50 = arith.addf %43, %49 : vector<16x256xf32>
    %c0_15 = arith.constant 0 : index
    %c0_16 = arith.constant 0 : index
    %c0_17 = arith.constant 0 : index
    %51 = vector.load %arg3[%c0_15, %c0_16, %c0_17] : memref<1x1x256xf32, #tpu.memory_space<vmem>>, vector<1x1x256xf32>
    %52 = vector.shape_cast %51 : vector<1x1x256xf32> to vector<1x256xf32>
    %53 = vector.broadcast %34 : vector<1x256xi32> to vector<16x256xi32>
    %54 = arith.cmpi eq, %3, %53 : vector<16x256xi32>
    %cst_18 = arith.constant 1.000000e+00 : f32
    %55 = vector.broadcast %cst_18 : f32 to vector<1x256xf32>
    %56 = arith.subf %55, %31 : vector<1x256xf32>
    %cst_19 = arith.constant 0.000000e+00 : f32
    %57 = vector.shape_cast %56 : vector<1x256xf32> to vector<1x256xf32>
    %58 = vector.broadcast %57 : vector<1x256xf32> to vector<16x256xf32>
    %59 = vector.broadcast %cst_19 : f32 to vector<16x256xf32>
    %60 = arith.select %54, %58, %59 : vector<16x256xi1>, vector<16x256xf32>
    %61 = vector.broadcast %35 : vector<1x256xi32> to vector<16x256xi32>
    %62 = arith.cmpi eq, %3, %61 : vector<16x256xi32>
    %cst_20 = arith.constant 0.000000e+00 : f32
    %63 = vector.shape_cast %31 : vector<1x256xf32> to vector<1x256xf32>
    %64 = vector.broadcast %63 : vector<1x256xf32> to vector<16x256xf32>
    %65 = vector.broadcast %cst_20 : f32 to vector<16x256xf32>
    %66 = arith.select %62, %64, %65 : vector<16x256xi1>, vector<16x256xf32>
    %67 = arith.addf %60, %66 : vector<16x256xf32>
    %cst_21 = arith.constant 5.000000e-01 : f32
    %68 = vector.broadcast %cst_21 : f32 to vector<1x256xf32>
    %69 = arith.mulf %68, %52 : vector<1x256xf32>
    %70 = vector.broadcast %69 : vector<1x256xf32> to vector<16x256xf32>
    %71 = arith.mulf %67, %70 : vector<16x256xf32>
    %c0_22 = arith.constant 0 : index
    %c0_23 = arith.constant 0 : index
    %c0_24 = arith.constant 0 : index
    %72 = vector.load %arg1[%c0_22, %c0_23, %c0_24] : memref<1x48x16xf32, #tpu.memory_space<vmem>>, vector<1x48x16xf32>
    %73 = vector.shape_cast %72 : vector<1x48x16xf32> to vector<48x16xf32>
    %cst_25 = arith.constant dense<0.000000e+00> : vector<48x256xf32>
    %74 = tpu.matmul %73, %50, %cst_25 {dimension_numbers = #tpu.dot_dimension_numbers<[1], [0], [0], [1], [0, 0, 1, 1], [], []>} : vector<48x16xf32>, vector<16x256xf32>, vector<48x256xf32> -> vector<48x256xf32>
    %75 = vector.extract_strided_slice %74 {offsets = [0, 0], sizes = [16, 256], strides = [1, 1]} : vector<48x256xf32> to vector<16x256xf32>
    %76 = arith.mulf %75, %71 : vector<16x256xf32>
    %cst_26 = arith.constant dense<0.000000e+00> : vector<256xf32>
    %77 = vector.multi_reduction <add>, %76, %cst_26 [0] : vector<16x256xf32> to vector<256xf32>
    %78 = vector.shape_cast %77 : vector<256xf32> to vector<1x256xf32>
    %79 = vector.extract_strided_slice %74 {offsets = [16, 0], sizes = [16, 256], strides = [1, 1]} : vector<48x256xf32> to vector<16x256xf32>
    %80 = arith.mulf %79, %71 : vector<16x256xf32>
    %cst_27 = arith.constant dense<0.000000e+00> : vector<256xf32>
    %81 = vector.multi_reduction <add>, %80, %cst_27 [0] : vector<16x256xf32> to vector<256xf32>
    %82 = vector.shape_cast %81 : vector<256xf32> to vector<1x256xf32>
    %83 = vector.extract_strided_slice %74 {offsets = [32, 0], sizes = [16, 256], strides = [1, 1]} : vector<48x256xf32> to vector<16x256xf32>
    %84 = arith.mulf %83, %71 : vector<16x256xf32>
    %cst_28 = arith.constant dense<0.000000e+00> : vector<256xf32>
    %85 = vector.multi_reduction <add>, %84, %cst_28 [0] : vector<16x256xf32> to vector<256xf32>
    %86 = vector.shape_cast %85 : vector<256xf32> to vector<1x256xf32>
    %87 = tpu.concatenate %78, %82, %86 in 0 : vector<1x256xf32>, vector<1x256xf32>, vector<1x256xf32> -> vector<3x256xf32>
    %c0_29 = arith.constant 0 : index
    %c0_30 = arith.constant 0 : index
    %c0_31 = arith.constant 0 : index
    %88 = vector.load %arg5[%c0_29, %c0_30, %c0_31] : memref<1x2x256xf32, #tpu.memory_space<vmem>>, vector<1x2x256xf32>
    %89 = vector.shape_cast %88 : vector<1x2x256xf32> to vector<2x256xf32>
    %90 = vector.extract_strided_slice %1 {offsets = [0, 0], sizes = [1, 256], strides = [1, 1]} : vector<2x256xf32> to vector<1x256xf32>
    %91 = vector.extract_strided_slice %89 {offsets = [0, 0], sizes = [1, 256], strides = [1, 1]} : vector<2x256xf32> to vector<1x256xf32>
    %92 = arith.addf %90, %91 : vector<1x256xf32>
    %cst_32 = arith.constant 0.000000e+00 : f32
    %cst_33 = arith.constant 1.500000e+01 : f32
    %93 = vector.broadcast %cst_32 : f32 to vector<1x256xf32>
    %94 = arith.maximumf %93, %92 : vector<1x256xf32>
    %95 = vector.broadcast %cst_33 : f32 to vector<1x256xf32>
    %96 = arith.minimumf %95, %94 : vector<1x256xf32>
    %97 = vector.extract_strided_slice %1 {offsets = [1, 0], sizes = [1, 256], strides = [1, 1]} : vector<2x256xf32> to vector<1x256xf32>
    %98 = vector.extract_strided_slice %89 {offsets = [1, 0], sizes = [1, 256], strides = [1, 1]} : vector<2x256xf32> to vector<1x256xf32>
    %99 = arith.addf %97, %98 : vector<1x256xf32>
    %cst_34 = arith.constant 0.000000e+00 : f32
    %cst_35 = arith.constant 1.500000e+01 : f32
    %100 = vector.broadcast %cst_34 : f32 to vector<1x256xf32>
    %101 = arith.maximumf %100, %99 : vector<1x256xf32>
    %102 = vector.broadcast %cst_35 : f32 to vector<1x256xf32>
    %103 = arith.minimumf %102, %101 : vector<1x256xf32>
    %104 = math.floor %96 : vector<1x256xf32>
    %105 = math.floor %103 : vector<1x256xf32>
    %cst_36 = arith.constant 1.000000e+00 : f32
    %106 = vector.broadcast %cst_36 : f32 to vector<1x256xf32>
    %107 = arith.addf %104, %106 : vector<1x256xf32>
    %cst_37 = arith.constant 1.500000e+01 : f32
    %108 = vector.broadcast %cst_37 : f32 to vector<1x256xf32>
    %109 = arith.minimumf %107, %108 : vector<1x256xf32>
    %cst_38 = arith.constant 1.000000e+00 : f32
    %110 = vector.broadcast %cst_38 : f32 to vector<1x256xf32>
    %111 = arith.addf %105, %110 : vector<1x256xf32>
    %cst_39 = arith.constant 1.500000e+01 : f32
    %112 = vector.broadcast %cst_39 : f32 to vector<1x256xf32>
    %113 = arith.minimumf %111, %112 : vector<1x256xf32>
    %114 = arith.subf %96, %104 : vector<1x256xf32>
    %115 = arith.subf %103, %105 : vector<1x256xf32>
    %116 = arith.fptosi %104 : vector<1x256xf32> to vector<1x256xi32>
    %117 = arith.fptosi %109 : vector<1x256xf32> to vector<1x256xi32>
    %118 = arith.fptosi %105 : vector<1x256xf32> to vector<1x256xi32>
    %119 = arith.fptosi %113 : vector<1x256xf32> to vector<1x256xi32>
    %120 = vector.broadcast %116 : vector<1x256xi32> to vector<16x256xi32>
    %121 = arith.cmpi eq, %2, %120 : vector<16x256xi32>
    %cst_40 = arith.constant 1.000000e+00 : f32
    %122 = vector.broadcast %cst_40 : f32 to vector<1x256xf32>
    %123 = arith.subf %122, %114 : vector<1x256xf32>
    %cst_41 = arith.constant 0.000000e+00 : f32
    %124 = vector.shape_cast %123 : vector<1x256xf32> to vector<1x256xf32>
    %125 = vector.broadcast %124 : vector<1x256xf32> to vector<16x256xf32>
    %126 = vector.broadcast %cst_41 : f32 to vector<16x256xf32>
    %127 = arith.select %121, %125, %126 : vector<16x256xi1>, vector<16x256xf32>
    %128 = vector.broadcast %117 : vector<1x256xi32> to vector<16x256xi32>
    %129 = arith.cmpi eq, %2, %128 : vector<16x256xi32>
    %cst_42 = arith.constant 0.000000e+00 : f32
    %130 = vector.shape_cast %114 : vector<1x256xf32> to vector<1x256xf32>
    %131 = vector.broadcast %130 : vector<1x256xf32> to vector<16x256xf32>
    %132 = vector.broadcast %cst_42 : f32 to vector<16x256xf32>
    %133 = arith.select %129, %131, %132 : vector<16x256xi1>, vector<16x256xf32>
    %134 = arith.addf %127, %133 : vector<16x256xf32>
    %c0_43 = arith.constant 0 : index
    %c0_44 = arith.constant 0 : index
    %c0_45 = arith.constant 0 : index
    %135 = vector.load %arg6[%c0_43, %c0_44, %c0_45] : memref<1x1x256xf32, #tpu.memory_space<vmem>>, vector<1x1x256xf32>
    %136 = vector.shape_cast %135 : vector<1x1x256xf32> to vector<1x256xf32>
    %137 = vector.broadcast %118 : vector<1x256xi32> to vector<16x256xi32>
    %138 = arith.cmpi eq, %3, %137 : vector<16x256xi32>
    %cst_46 = arith.constant 1.000000e+00 : f32
    %139 = vector.broadcast %cst_46 : f32 to vector<1x256xf32>
    %140 = arith.subf %139, %115 : vector<1x256xf32>
    %cst_47 = arith.constant 0.000000e+00 : f32
    %141 = vector.shape_cast %140 : vector<1x256xf32> to vector<1x256xf32>
    %142 = vector.broadcast %141 : vector<1x256xf32> to vector<16x256xf32>
    %143 = vector.broadcast %cst_47 : f32 to vector<16x256xf32>
    %144 = arith.select %138, %142, %143 : vector<16x256xi1>, vector<16x256xf32>
    %145 = vector.broadcast %119 : vector<1x256xi32> to vector<16x256xi32>
    %146 = arith.cmpi eq, %3, %145 : vector<16x256xi32>
    %cst_48 = arith.constant 0.000000e+00 : f32
    %147 = vector.shape_cast %115 : vector<1x256xf32> to vector<1x256xf32>
    %148 = vector.broadcast %147 : vector<1x256xf32> to vector<16x256xf32>
    %149 = vector.broadcast %cst_48 : f32 to vector<16x256xf32>
    %150 = arith.select %146, %148, %149 : vector<16x256xi1>, vector<16x256xf32>
    %151 = arith.addf %144, %150 : vector<16x256xf32>
    %cst_49 = arith.constant 5.000000e-01 : f32
    %152 = vector.broadcast %cst_49 : f32 to vector<1x256xf32>
    %153 = arith.mulf %152, %136 : vector<1x256xf32>
    %154 = vector.broadcast %153 : vector<1x256xf32> to vector<16x256xf32>
    %155 = arith.mulf %151, %154 : vector<16x256xf32>
    %c0_50 = arith.constant 0 : index
    %c0_51 = arith.constant 0 : index
    %c0_52 = arith.constant 0 : index
    %156 = vector.load %arg4[%c0_50, %c0_51, %c0_52] : memref<1x48x16xf32, #tpu.memory_space<vmem>>, vector<1x48x16xf32>
    %157 = vector.shape_cast %156 : vector<1x48x16xf32> to vector<48x16xf32>
    %cst_53 = arith.constant dense<0.000000e+00> : vector<48x256xf32>
    %158 = tpu.matmul %157, %134, %cst_53 {dimension_numbers = #tpu.dot_dimension_numbers<[1], [0], [0], [1], [0, 0, 1, 1], [], []>} : vector<48x16xf32>, vector<16x256xf32>, vector<48x256xf32> -> vector<48x256xf32>
    %159 = vector.extract_strided_slice %158 {offsets = [0, 0], sizes = [16, 256], strides = [1, 1]} : vector<48x256xf32> to vector<16x256xf32>
    %160 = arith.mulf %159, %155 : vector<16x256xf32>
    %cst_54 = arith.constant dense<0.000000e+00> : vector<256xf32>
    %161 = vector.multi_reduction <add>, %160, %cst_54 [0] : vector<16x256xf32> to vector<256xf32>
    %162 = vector.shape_cast %161 : vector<256xf32> to vector<1x256xf32>
    %163 = vector.extract_strided_slice %158 {offsets = [16, 0], sizes = [16, 256], strides = [1, 1]} : vector<48x256xf32> to vector<16x256xf32>
    %164 = arith.mulf %163, %155 : vector<16x256xf32>
    %cst_55 = arith.constant dense<0.000000e+00> : vector<256xf32>
    %165 = vector.multi_reduction <add>, %164, %cst_55 [0] : vector<16x256xf32> to vector<256xf32>
    %166 = vector.shape_cast %165 : vector<256xf32> to vector<1x256xf32>
    %167 = vector.extract_strided_slice %158 {offsets = [32, 0], sizes = [16, 256], strides = [1, 1]} : vector<48x256xf32> to vector<16x256xf32>
    %168 = arith.mulf %167, %155 : vector<16x256xf32>
    %cst_56 = arith.constant dense<0.000000e+00> : vector<256xf32>
    %169 = vector.multi_reduction <add>, %168, %cst_56 [0] : vector<16x256xf32> to vector<256xf32>
    %170 = vector.shape_cast %169 : vector<256xf32> to vector<1x256xf32>
    %171 = tpu.concatenate %162, %166, %170 in 0 : vector<1x256xf32>, vector<1x256xf32>, vector<1x256xf32> -> vector<3x256xf32>
    %172 = arith.addf %87, %171 : vector<3x256xf32>
    %c0_57 = arith.constant 0 : index
    %c0_58 = arith.constant 0 : index
    %c0_59 = arith.constant 0 : index
    %173 = vector.load %arg8[%c0_57, %c0_58, %c0_59] : memref<1x3x256xf32, #tpu.memory_space<vmem>>, vector<1x3x256xf32>
    %174 = vector.shape_cast %173 : vector<1x3x256xf32> to vector<3x256xf32>
    %175 = vector.shape_cast %172 : vector<3x256xf32> to vector<1x3x256xf32>
    tpu.vector_store %arg8[%c0_57, %c0_58, %c0_59], %175 {strides = array<i32>} : memref<1x3x256xf32, #tpu.memory_space<vmem>>, vector<1x3x256xf32>,
    return
  }
  func.func @transform_0(%arg0: i32) -> (i32, i32, i32) {
    %c0_i32 = arith.constant 0 : i32
    %c0_i32_0 = arith.constant 0 : i32
    %c0_i32_1 = arith.constant 0 : i32
    return %arg0, %c0_i32, %c0_i32_0 : i32, i32, i32
  }
  func.func @transform_1(%arg0: i32) -> (i32, i32, i32) {
    %c0_i32 = arith.constant 0 : i32
    %c0_i32_0 = arith.constant 0 : i32
    %c0_i32_1 = arith.constant 0 : i32
    return %arg0, %c0_i32, %c0_i32_0 : i32, i32, i32
  }
  func.func @transform_2(%arg0: i32) -> (i32, i32, i32) {
    %c0_i32 = arith.constant 0 : i32
    %c0_i32_0 = arith.constant 0 : i32
    %c0_i32_1 = arith.constant 0 : i32
    return %arg0, %c0_i32, %c0_i32_0 : i32, i32, i32
  }
  func.func @transform_3(%arg0: i32) -> (i32, i32, i32) {
    %c0_i32 = arith.constant 0 : i32
    %c0_i32_0 = arith.constant 0 : i32
    %c0_i32_1 = arith.constant 0 : i32
    return %arg0, %c0_i32, %c0_i32_0 : i32, i32, i32
  }
  func.func @transform_4(%arg0: i32) -> (i32, i32, i32) {
    %c0_i32 = arith.constant 0 : i32
    %c0_i32_0 = arith.constant 0 : i32
    %c0_i32_1 = arith.constant 0 : i32
    return %arg0, %c0_i32, %c0_i32_0 : i32, i32, i32
  }
  func.func @transform_5(%arg0: i32) -> (i32, i32, i32) {
    %c0_i32 = arith.constant 0 : i32
    %c0_i32_0 = arith.constant 0 : i32
    %c0_i32_1 = arith.constant 0 : i32
    return %arg0, %c0_i32, %c0_i32_0 : i32, i32, i32
  }
  func.func @transform_6(%arg0: i32) -> (i32, i32, i32) {
    %c0_i32 = arith.constant 0 : i32
    %c0_i32_0 = arith.constant 0 : i32
    %c0_i32_1 = arith.constant 0 : i32
    return %arg0, %c0_i32, %c0_i32_0 : i32, i32, i32
  }
  func.func @transform_7(%arg0: i32) -> (i32, i32, i32) {
    %c0_i32 = arith.constant 0 : i32
    %c0_i32_0 = arith.constant 0 : i32
    %c0_i32_1 = arith.constant 0 : i32
    return %arg0, %c0_i32, %c0_i32_0 : i32, i32, i32
  }
}

</mosaic_0001>

<llo_original>
// kernel: tpu_custom_call.1
$region0: #{tpu_custom_call.1}
  #allocation0 [shape = 'u32[]', space=smem, size = 0x4, offset = 0x4, fixed_abs, tag = 'smem constant byte address 0x4 - core index']
  #allocation1 [shape = 'u32[144,128]{1,0:T(1,128)}', space=vmem, size = 0x12000, scoped, tag = 'internal scratch']
  %s0 = inlined_call_operand.vmem [shape: f32[2,48,16], index: 0, kind: input, shape index: {}]
  %s1 = inlined_call_operand.vmem [shape: f32[2,2,256], index: 1, kind: input, shape index: {}]
  %s2 = inlined_call_operand.vmem [shape: f32[2,1,256], index: 2, kind: input, shape index: {}]
  %s3 = inlined_call_operand.vmem [shape: f32[2,48,16], index: 3, kind: input, shape index: {}]
  %s4 = inlined_call_operand.vmem [shape: f32[2,2,256], index: 4, kind: input, shape index: {}]
  %s5 = inlined_call_operand.vmem [shape: f32[2,1,256], index: 5, kind: input, shape index: {}]
  %s6 = inlined_call_operand.vmem [shape: f32[2,2,256], index: 6, kind: input, shape index: {}]
  %s7 = inlined_call_operand.vmem [shape: f32[2,3,256], index: 7, kind: output, shape index: {}]
  %s8 = sld [smem:[#allocation0]]
  $region61: #{tpu_custom_call.1} parent=0
    _
  %s10 = ssub.s32 1, %s8
  %s11 = scalar_select 0, %s10, %s8
  loop: start=0, step=1, limit=4
  $region2: #{tpu_custom_call.1} parent=0 // loop_pre_header
    _
  $region3: #{tpu_custom_call.1} parent=0 // loop_header
    %s13 = sphi 0, %s17
    %p14 = scmp.ge.s32.totalorder %s13, 4
    %s23 = sphi 0, %s25
    %s26 = sphi 0, %s23
    %s27 = sphi 0, %s26
    %s43 = sphi 0, %s27
    %s49 = sphi 0, %s51
    %s52 = sphi 0, %s49
    %s53 = sphi 0, %s52
    %s69 = sphi 0, %s53
    %s75 = sphi 0, %s77
    %s78 = sphi 0, %s75
    %s79 = sphi 0, %s78
    %s95 = sphi 0, %s79
    %s101 = sphi 0, %s103
    %s104 = sphi 0, %s101
    %s105 = sphi 0, %s104
    %s121 = sphi 0, %s105
    %s127 = sphi 0, %s129
    %s130 = sphi 0, %s127
    %s131 = sphi 0, %s130
    %s147 = sphi 0, %s131
    %s153 = sphi 0, %s155
    %s156 = sphi 0, %s153
    %s157 = sphi 0, %s156
    %s173 = sphi 0, %s157
    %s179 = sphi 0, %s181
    %s182 = sphi 0, %s179
    %s183 = sphi 0, %s182
    %s199 = sphi 0, %s183
    %s205 = sphi 0, %s207
    %s208 = sphi 0, %s205
    %s209 = sphi 0, %s208
    %s225 = sphi 0, %s209
  $region4: #{tpu_custom_call.1} parent=0 // loop_header_branch
    %16 = sbr.rel (%p14) target = $region8
  $region5: #{tpu_custom_call.1} parent=0 // loop_body
    %s18 = ssub.s32 %s13, 1
    %s19 = ssub.s32 %s13, 2
    %s20 = sadd.s32 %s13, 1
    %s21 = ssub.s32 %s13, %s20
    %p22 = scmp.eq.s32.totalorder %s21, 0
    %s24 = sadd.s32 %s23, 1
    %s25 = scalar_select %p22, %s23, %s24
    %p28 = pneg %p22
    %p29 = scmp.eq.s32.totalorder %s13, 1
    %p30 = por %p28, %p29
    %p31 = scmp.ne.s32.totalorder %s23, %s26
    %p32 = scmp.eq.s32.totalorder %s13, 0
    %p33 = por %p31, %p32
    %p34 = scmp.ne.s32.totalorder %s23, %s26
    %p35 = scmp.eq.s32.totalorder %s18, 1
    %p36 = por %p34, %p35
    %p37 = scmp.ne.s32.totalorder %s26, %s27
    %p38 = scmp.eq.s32.totalorder %s18, 0
    %p39 = por %p37, %p38
    %p40 = scmp.ne.s32.totalorder %s26, %s27
    %p41 = scmp.eq.s32.totalorder %s19, 1
    %p42 = por %p40, %p41
    %p44 = scmp.ne.s32.totalorder %s27, %s43
    %p45 = scmp.eq.s32.totalorder %s19, 0
    %p46 = por %p44, %p45
    %s47 = ssub.s32 %s13, %s20
    %p48 = scmp.eq.s32.totalorder %s47, 0
    %s50 = sadd.s32 %s49, 1
    %s51 = scalar_select %p48, %s49, %s50
    %p54 = pneg %p48
    %p55 = scmp.eq.s32.totalorder %s13, 1
    %p56 = por %p54, %p55
    %p57 = scmp.ne.s32.totalorder %s49, %s52
    %p58 = scmp.eq.s32.totalorder %s13, 0
    %p59 = por %p57, %p58
    %p60 = scmp.ne.s32.totalorder %s49, %s52
    %p61 = scmp.eq.s32.totalorder %s18, 1
    %p62 = por %p60, %p61
    %p63 = scmp.ne.s32.totalorder %s52, %s53
    %p64 = scmp.eq.s32.totalorder %s18, 0
    %p65 = por %p63, %p64
    %p66 = scmp.ne.s32.totalorder %s52, %s53
    %p67 = scmp.eq.s32.totalorder %s19, 1
    %p68 = por %p66, %p67
    %p70 = scmp.ne.s32.totalorder %s53, %s69
    %p71 = scmp.eq.s32.totalorder %s19, 0
    %p72 = por %p70, %p71
    %s73 = ssub.s32 %s13, %s20
    %p74 = scmp.eq.s32.totalorder %s73, 0
    %s76 = sadd.s32 %s75, 1
    %s77 = scalar_select %p74, %s75, %s76
    %p80 = pneg %p74
    %p81 = scmp.eq.s32.totalorder %s13, 1
    %p82 = por %p80, %p81
    %p83 = scmp.ne.s32.totalorder %s75, %s78
    %p84 = scmp.eq.s32.totalorder %s13, 0
    %p85 = por %p83, %p84
    %p86 = scmp.ne.s32.totalorder %s75, %s78
    %p87 = scmp.eq.s32.totalorder %s18, 1
    %p88 = por %p86, %p87
    %p89 = scmp.ne.s32.totalorder %s78, %s79
    %p90 = scmp.eq.s32.totalorder %s18, 0
    %p91 = por %p89, %p90
    %p92 = scmp.ne.s32.totalorder %s78, %s79
    %p93 = scmp.eq.s32.totalorder %s19, 1
    %p94 = por %p92, %p93
    %p96 = scmp.ne.s32.totalorder %s79, %s95
    %p97 = scmp.eq.s32.totalorder %s19, 0
    %p98 = por %p96, %p97
    %s99 = ssub.s32 %s13, %s20
    %p100 = scmp.eq.s32.totalorder %s99, 0
    %s102 = sadd.s32 %s101, 1
    %s103 = scalar_select %p100, %s101, %s102
    %p106 = pneg %p100
    %p107 = scmp.eq.s32.totalorder %s13, 1
    %p108 = por %p106, %p107
    %p109 = scmp.ne.s32.totalorder %s101, %s104
    %p110 = scmp.eq.s32.totalorder %s13, 0
    %p111 = por %p109, %p110
    %p112 = scmp.ne.s32.totalorder %s101, %s104
    %p113 = scmp.eq.s32.totalorder %s18, 1
    %p114 = por %p112, %p113
    %p115 = scmp.ne.s32.totalorder %s104, %s105
    %p116 = scmp.eq.s32.totalorder %s18, 0
    %p117 = por %p115, %p116
    %p118 = scmp.ne.s32.totalorder %s104, %s105
    %p119 = scmp.eq.s32.totalorder %s19, 1
    %p120 = por %p118, %p119
    %p122 = scmp.ne.s32.totalorder %s105, %s121
    %p123 = scmp.eq.s32.totalorder %s19, 0
    %p124 = por %p122, %p123
    %s125 = ssub.s32 %s13, %s20
    %p126 = scmp.eq.s32.totalorder %s125, 0
    %s128 = sadd.s32 %s127, 1
    %s129 = scalar_select %p126, %s127, %s128
    %p132 = pneg %p126
    %p133 = scmp.eq.s32.totalorder %s13, 1
    %p134 = por %p132, %p133
    %p135 = scmp.ne.s32.totalorder %s127, %s130
    %p136 = scmp.eq.s32.totalorder %s13, 0
    %p137 = por %p135, %p136
    %p138 = scmp.ne.s32.totalorder %s127, %s130
    %p139 = scmp.eq.s32.totalorder %s18, 1
    %p140 = por %p138, %p139
    %p141 = scmp.ne.s32.totalorder %s130, %s131
    %p142 = scmp.eq.s32.totalorder %s18, 0
    %p143 = por %p141, %p142
    %p144 = scmp.ne.s32.totalorder %s130, %s131
    %p145 = scmp.eq.s32.totalorder %s19, 1
    %p146 = por %p144, %p145
    %p148 = scmp.ne.s32.totalorder %s131, %s147
    %p149 = scmp.eq.s32.totalorder %s19, 0
    %p150 = por %p148, %p149
    %s151 = ssub.s32 %s13, %s20
    %p152 = scmp.eq.s32.totalorder %s151, 0
    %s154 = sadd.s32 %s153, 1
    %s155 = scalar_select %p152, %s153, %s154
    %p158 = pneg %p152
    %p159 = scmp.eq.s32.totalorder %s13, 1
    %p160 = por %p158, %p159
    %p161 = scmp.ne.s32.totalorder %s153, %s156
    %p162 = scmp.eq.s32.totalorder %s13, 0
    %p163 = por %p161, %p162
    %p164 = scmp.ne.s32.totalorder %s153, %s156
    %p165 = scmp.eq.s32.totalorder %s18, 1
    %p166 = por %p164, %p165
    %p167 = scmp.ne.s32.totalorder %s156, %s157
    %p168 = scmp.eq.s32.totalorder %s18, 0
    %p169 = por %p167, %p168
    %p170 = scmp.ne.s32.totalorder %s156, %s157
    %p171 = scmp.eq.s32.totalorder %s19, 1
    %p172 = por %p170, %p171
    %p174 = scmp.ne.s32.totalorder %s157, %s173
    %p175 = scmp.eq.s32.totalorder %s19, 0
    %p176 = por %p174, %p175
    %s177 = ssub.s32 %s13, %s20
    %p178 = scmp.eq.s32.totalorder %s177, 0
    %s180 = sadd.s32 %s179, 1
    %s181 = scalar_select %p178, %s179, %s180
    %p184 = pneg %p178
    %p185 = scmp.eq.s32.totalorder %s13, 1
    %p186 = por %p184, %p185
    %p187 = scmp.ne.s32.totalorder %s179, %s182
    %p188 = scmp.eq.s32.totalorder %s13, 0
    %p189 = por %p187, %p188
    %p190 = scmp.ne.s32.totalorder %s179, %s182
    %p191 = scmp.eq.s32.totalorder %s18, 1
    %p192 = por %p190, %p191
    %p193 = scmp.ne.s32.totalorder %s182, %s183
    %p194 = scmp.eq.s32.totalorder %s18, 0
    %p195 = por %p193, %p194
    %p196 = scmp.ne.s32.totalorder %s182, %s183
    %p197 = scmp.eq.s32.totalorder %s19, 1
    %p198 = por %p196, %p197
    %p200 = scmp.ne.s32.totalorder %s183, %s199
    %p201 = scmp.eq.s32.totalorder %s19, 0
    %p202 = por %p200, %p201
    %s203 = ssub.s32 %s13, %s20
    %p204 = scmp.eq.s32.totalorder %s203, 0
    %s206 = sadd.s32 %s205, 1
    %s207 = scalar_select %p204, %s205, %s206
    %p210 = pneg %p204
    %p211 = scmp.eq.s32.totalorder %s13, 1
    %p212 = por %p210, %p211
    %p213 = scmp.ne.s32.totalorder %s205, %s208
    %p214 = scmp.eq.s32.totalorder %s13, 0
    %p215 = por %p213, %p214
    %p216 = scmp.ne.s32.totalorder %s205, %s208
    %p217 = scmp.eq.s32.totalorder %s18, 1
    %p218 = por %p216, %p217
    %p219 = scmp.ne.s32.totalorder %s208, %s209
    %p220 = scmp.eq.s32.totalorder %s18, 0
    %p221 = por %p219, %p220
    %p222 = scmp.ne.s32.totalorder %s208, %s209
    %p223 = scmp.eq.s32.totalorder %s19, 1
    %p224 = por %p222, %p223
    %p226 = scmp.ne.s32.totalorder %s209, %s225
    %p227 = scmp.eq.s32.totalorder %s19, 0
    %p228 = por %p226, %p227
    %p229 = scmp.le.s32.totalorder 1, %s13
    %p230 = scmp.lt.s32.totalorder %s13, 3
    %p231 = pnand %p229, %p230
    %p232 = pneg %p231
    // Predicated region
    $region9: #{tpu_custom_call.1} parent=5 // pred_check
      _
    $region10: #{tpu_custom_call.1} parent=5 // pred_check_branch
      %234 = sbr.rel (%p231) target = $region12
    $region11: #{tpu_custom_call.1} parent=5 // pred_region
      %s235 = ssub.s32 %s13, 1
    $region12: #{tpu_custom_call.1} parent=5 // pred_fallthru
      _
    %p236 = scmp.lt.s32.totalorder %s13, 2
    // Predicated region
    $region13: #{tpu_custom_call.1} parent=5 // pred_check
      %p237 = pneg %p236
    $region14: #{tpu_custom_call.1} parent=5 // pred_check_branch
      %239 = sbr.rel (%p237) target = $region16
    $region15: #{tpu_custom_call.1} parent=5 // pred_region
      // Predicated region
      $region17: #{tpu_custom_call.1} parent=15 // pred_check
        %p240 = pneg %p33
      $region18: #{tpu_custom_call.1} parent=15 // pred_check_branch
        %242 = sbr.rel (%p240) target = $region20
      $region19: #{tpu_custom_call.1} parent=15 // pred_region
        %p243 = scmp.lt.s32.totalorder %s13, 1
        %s244 = scalar_select %p243, %s13, 1
        %s245 = smul.addr %s244, 6
        %s246 = smul.addr %s245, 8
        %s247 = scalar_lea.vmem %s0, %s246
      $region20: #{tpu_custom_call.1} parent=15 // pred_fallthru
        _
      // Predicated region
      $region21: #{tpu_custom_call.1} parent=15 // pred_check
        %p248 = pneg %p59
      $region22: #{tpu_custom_call.1} parent=15 // pred_check_branch
        %250 = sbr.rel (%p248) target = $region24
      $region23: #{tpu_custom_call.1} parent=15 // pred_region
        %p251 = scmp.lt.s32.totalorder %s13, 1
        %s252 = scalar_select %p251, %s13, 1
        %s253 = smul.addr %s252, 2
        %s254 = smul.addr %s253, 2
        %s255 = scalar_lea.vmem %s1, %s254
      $region24: #{tpu_custom_call.1} parent=15 // pred_fallthru
        _
      // Predicated region
      $region25: #{tpu_custom_call.1} parent=15 // pred_check
        %p256 = pneg %p85
      $region26: #{tpu_custom_call.1} parent=15 // pred_check_branch
        %258 = sbr.rel (%p256) target = $region28
      $region27: #{tpu_custom_call.1} parent=15 // pred_region
        %p259 = scmp.lt.s32.totalorder %s13, 1
        %s260 = scalar_select %p259, %s13, 1
        %s261 = smul.addr %s260, 2
        %s262 = scalar_lea.vmem %s2, %s261
      $region28: #{tpu_custom_call.1} parent=15 // pred_fallthru
        _
      // Predicated region
      $region29: #{tpu_custom_call.1} parent=15 // pred_check
        %p263 = pneg %p111
      $region30: #{tpu_custom_call.1} parent=15 // pred_check_branch
        %265 = sbr.rel (%p263) target = $region32
      $region31: #{tpu_custom_call.1} parent=15 // pred_region
        %p266 = scmp.lt.s32.totalorder %s13, 1
        %s267 = scalar_select %p266, %s13, 1
        %s268 = smul.addr %s267, 6
        %s269 = smul.addr %s268, 8
        %s270 = scalar_lea.vmem %s3, %s269
      $region32: #{tpu_custom_call.1} parent=15 // pred_fallthru
        _
      // Predicated region
      $region33: #{tpu_custom_call.1} parent=15 // pred_check
        %p271 = pneg %p137
      $region34: #{tpu_custom_call.1} parent=15 // pred_check_branch
        %273 = sbr.rel (%p271) target = $region36
      $region35: #{tpu_custom_call.1} parent=15 // pred_region
        %p274 = scmp.lt.s32.totalorder %s13, 1
        %s275 = scalar_select %p274, %s13, 1
        %s276 = smul.addr %s275, 2
        %s277 = smul.addr %s276, 2
        %s278 = scalar_lea.vmem %s4, %s277
      $region36: #{tpu_custom_call.1} parent=15 // pred_fallthru
        _
      // Predicated region
      $region37: #{tpu_custom_call.1} parent=15 // pred_check
        %p279 = pneg %p163
      $region38: #{tpu_custom_call.1} parent=15 // pred_check_branch
        %281 = sbr.rel (%p279) target = $region40
      $region39: #{tpu_custom_call.1} parent=15 // pred_region
        %p282 = scmp.lt.s32.totalorder %s13, 1
        %s283 = scalar_select %p282, %s13, 1
        %s284 = smul.addr %s283, 2
        %s285 = scalar_lea.vmem %s5, %s284
      $region40: #{tpu_custom_call.1} parent=15 // pred_fallthru
        _
      // Predicated region
      $region41: #{tpu_custom_call.1} parent=15 // pred_check
        %p286 = pneg %p189
      $region42: #{tpu_custom_call.1} parent=15 // pred_check_branch
        %288 = sbr.rel (%p286) target = $region44
      $region43: #{tpu_custom_call.1} parent=15 // pred_region
        %p289 = scmp.lt.s32.totalorder %s13, 1
        %s290 = scalar_select %p289, %s13, 1
        %s291 = smul.addr %s290, 2
        %s292 = smul.addr %s291, 2
        %s293 = scalar_lea.vmem %s6, %s292
      $region44: #{tpu_custom_call.1} parent=15 // pred_fallthru
        _
    $region16: #{tpu_custom_call.1} parent=5 // pred_fallthru
      _
    %p294 = scmp.le.s32.totalorder 1, %s13
    %p295 = scmp.lt.s32.totalorder %s13, 3
    %p296 = pnand %p294, %p295
    %p297 = pneg %p296
    // Predicated region
    $region45: #{tpu_custom_call.1} parent=5 // pred_check
      _
    $region46: #{tpu_custom_call.1} parent=5 // pred_check_branch
      %299 = sbr.rel (%p296) target = $region48
    $region47: #{tpu_custom_call.1} parent=5 // pred_region
      %s300 = ssub.s32 %s13, 1
      %p301 = scmp.lt.s32.totalorder %s18, 1
      %s302 = scalar_select %p301, %s18, 1
      %s303 = smul.addr %s302, 6
      %s304 = smul.addr %s303, 8
      %s305 = scalar_lea.vmem %s0, %s304
      %p306 = pneg %p39
      %p307 = pneg %p36
      %p308 = scmp.lt.s32.totalorder %s18, 1
      %s309 = scalar_select %p308, %s18, 1
      %s310 = smul.addr %s309, 2
      %s311 = smul.addr %s310, 2
      %s312 = scalar_lea.vmem %s1, %s311
      %p313 = pneg %p65
      %p314 = pneg %p62
      %p315 = scmp.lt.s32.totalorder %s18, 1
      %s316 = scalar_select %p315, %s18, 1
      %s317 = smul.addr %s316, 2
      %s318 = scalar_lea.vmem %s2, %s317
      %p319 = pneg %p91
      %p320 = pneg %p88
      %p321 = scmp.lt.s32.totalorder %s18, 1
      %s322 = scalar_select %p321, %s18, 1
      %s323 = smul.addr %s322, 6
      %s324 = smul.addr %s323, 8
      %s325 = scalar_lea.vmem %s3, %s324
      %p326 = pneg %p117
      %p327 = pneg %p114
      %p328 = scmp.lt.s32.totalorder %s18, 1
      %s329 = scalar_select %p328, %s18, 1
      %s330 = smul.addr %s329, 2
      %s331 = smul.addr %s330, 2
      %s332 = scalar_lea.vmem %s4, %s331
      %p333 = pneg %p143
      %p334 = pneg %p140
      %p335 = scmp.lt.s32.totalorder %s18, 1
      %s336 = scalar_select %p335, %s18, 1
      %s337 = smul.addr %s336, 2
      %s338 = scalar_lea.vmem %s5, %s337
      %p339 = pneg %p169
      %p340 = pneg %p166
      %p341 = scmp.lt.s32.totalorder %s18, 1
      %s342 = scalar_select %p341, %s18, 1
      %s343 = smul.addr %s342, 2
      %s344 = smul.addr %s343, 2
      %s345 = scalar_lea.vmem %s6, %s344
      %p346 = pneg %p195
      %p347 = pneg %p192
      %p348 = pneg %p221
      %p349 = pneg %p218
      %p350 = scmp.lt.s32.totalorder %s18, 1
      %s351 = scalar_select %p350, %s18, 1
      %s352 = smul.addr %s351, 2
      %s353 = smul.addr %s352, 4
      %s354 = scalar_lea.vmem %s7, %s353
      %p355 = scmp.lt.s32.totalorder %s18, 1
      %s356 = scalar_select %p355, %s18, 1
      %s357 = smul.addr %s356, 6
      %s358 = smul.addr %s357, 8
      %s359 = scalar_lea.vmem %s0, %s358
      %p360 = scmp.lt.s32.totalorder %s18, 1
      %s361 = scalar_select %p360, %s18, 1
      %s362 = smul.addr %s361, 2
      %s363 = smul.addr %s362, 2
      %s364 = scalar_lea.vmem %s1, %s363
      %p365 = scmp.lt.s32.totalorder %s18, 1
      %s366 = scalar_select %p365, %s18, 1
      %s367 = smul.addr %s366, 2
      %s368 = scalar_lea.vmem %s2, %s367
      %p369 = scmp.lt.s32.totalorder %s18, 1
      %s370 = scalar_select %p369, %s18, 1
      %s371 = smul.addr %s370, 6
      %s372 = smul.addr %s371, 8
      %s373 = scalar_lea.vmem %s3, %s372
      %p374 = scmp.lt.s32.totalorder %s18, 1
      %s375 = scalar_select %p374, %s18, 1
      %s376 = smul.addr %s375, 2
      %s377 = smul.addr %s376, 2
      %s378 = scalar_lea.vmem %s4, %s377
      %p379 = scmp.lt.s32.totalorder %s18, 1
      %s380 = scalar_select %p379, %s18, 1
      %s381 = smul.addr %s380, 2
      %s382 = scalar_lea.vmem %s5, %s381
      %p383 = scmp.lt.s32.totalorder %s18, 1
      %s384 = scalar_select %p383, %s18, 1
      %s385 = smul.addr %s384, 2
      %s386 = smul.addr %s385, 2
      %s387 = scalar_lea.vmem %s6, %s386
      %p388 = scmp.lt.s32.totalorder %s18, 1
      %s389 = scalar_select %p388, %s18, 1
      %s390 = smul.addr %s389, 2
      %s391 = smul.addr %s390, 4
      %s392 = scalar_lea.vmem %s7, %s391
      %v393 = vld [vmem:[%s387] sm:$0xf]
      %v394 = vlaneseq
      %v395 = vshrl.u32 %v394, 7
      %v396 = vadd.s32 %v395, 8
      %v397 = vld [vmem:[%s364] sm:$0xf]
      %v398 = vadd.f32 %v393, %v397
      %v399 = vmax.f32 %v398, 0.0
      %v400 = vmin.f32 %v399, 15.0
      %v401 = vfloor.f32 %v400
      %v402 = vadd.f32 %v401, 1.0
      %v403 = vmin.f32 %v402, 15.0
      %v404 = vsub.f32 %v400, %v401
      %v405 = vcvt.f32.s32.to.zero.pseudo %v401
      %v406 = vcvt.f32.s32.to.zero.pseudo %v403
      %v407 = vlaneseq
      %v408 = vshrl.u32 %v407, 7
      %v409 = vsub.s32 0, %v408
      %v410 = vrot.slane %v405, %v409
      %v411 = vlaneseq
      %v412 = vshrl.u32 %v411, 7
      %v413 = vsub.s32 2, %v412
      %v414 = vrot.slane %v405, %v413
      %v415 = vlaneseq
      %v416 = vshrl.u32 %v415, 7
      %v417 = vsub.s32 0, %v416
      %v418 = vrot.slane %v410, %v417
      %v419 = vlaneseq
      %v420 = vshrl.u32 %v419, 7
      %v421 = vsub.s32 0, %v420
      %v422 = vrot.slane %v414, %v421
      %vm423 = vcmp.eq.s32.totalorder %v395, %v418
      %vm424 = vcmp.eq.s32.totalorder %v395, %v422
      %vm425 = vcmp.eq.s32.totalorder %v396, %v418
      %vm426 = vcmp.eq.s32.totalorder %v396, %v422
      %v427 = vsub.f32 1.0, %v404
      %v429 = vlaneseq
      %v430 = vshrl.u32 %v429, 7
      %v431 = vsub.s32 0, %v430
      %v432 = vrot.slane %v427, %v431
      %v433 = vlaneseq
      %v434 = vshrl.u32 %v433, 7
      %v435 = vsub.s32 2, %v434
      %v436 = vrot.slane %v427, %v435
      %v439 = vlaneseq
      %v440 = vshrl.u32 %v439, 7
      %v441 = vsub.s32 0, %v440
      %v442 = vrot.slane %v432, %v441
      %v443 = vlaneseq
      %v444 = vshrl.u32 %v443, 7
      %v445 = vsub.s32 0, %v444
      %v446 = vrot.slane %v436, %v445
      %v447 = vsel %vm423, %v442, 0.0
      %v448 = vsel %vm424, %v446, 0.0
      %v449 = vsel %vm425, %v442, 0.0
      %v450 = vsel %vm426, %v446, 0.0
      %v451 = vlaneseq
      %v452 = vshrl.u32 %v451, 7
      %v453 = vsub.s32 0, %v452
      %v454 = vrot.slane %v406, %v453
      %v455 = vlaneseq
      %v456 = vshrl.u32 %v455, 7
      %v457 = vsub.s32 2, %v456
      %v458 = vrot.slane %v406, %v457
      %v459 = vlaneseq
      %v460 = vshrl.u32 %v459, 7
      %v461 = vsub.s32 0, %v460
      %v462 = vrot.slane %v454, %v461
      %v463 = vlaneseq
      %v464 = vshrl.u32 %v463, 7
      %v465 = vsub.s32 0, %v464
      %v466 = vrot.slane %v458, %v465
      %vm467 = vcmp.eq.s32.totalorder %v395, %v462
      %vm468 = vcmp.eq.s32.totalorder %v395, %v466
      %vm469 = vcmp.eq.s32.totalorder %v396, %v462
      %vm470 = vcmp.eq.s32.totalorder %v396, %v466
      %v472 = vlaneseq
      %v473 = vshrl.u32 %v472, 7
      %v474 = vsub.s32 0, %v473
      %v475 = vrot.slane %v404, %v474
      %v476 = vlaneseq
      %v477 = vshrl.u32 %v476, 7
      %v478 = vsub.s32 2, %v477
      %v479 = vrot.slane %v404, %v478
      %v482 = vlaneseq
      %v483 = vshrl.u32 %v482, 7
      %v484 = vsub.s32 0, %v483
      %v485 = vrot.slane %v475, %v484
      %v486 = vlaneseq
      %v487 = vshrl.u32 %v486, 7
      %v488 = vsub.s32 0, %v487
      %v489 = vrot.slane %v479, %v488
      %v490 = vsel %vm467, %v485, 0.0
      %v491 = vsel %vm468, %v489, 0.0
      %v492 = vsel %vm469, %v485, 0.0
      %v493 = vsel %vm470, %v489, 0.0
      %v494 = vadd.f32 %v447, %v490
      %v495 = vadd.f32 %v448, %v491
      %v496 = vadd.f32 %v449, %v492
      %v497 = vadd.f32 %v450, %v493
      %v498 = vld [vmem:[%s368] sm:$0x3]
      %v499 = vlaneseq
      %v500 = vshrl.u32 %v499, 7
      %v501 = vsub.s32 1, %v500
      %v502 = vrot.slane %v405, %v501
      %v503 = vlaneseq
      %v504 = vshrl.u32 %v503, 7
      %v505 = vsub.s32 3, %v504
      %v506 = vrot.slane %v405, %v505
      %v507 = vlaneseq
      %v508 = vshrl.u32 %v507, 7
      %v509 = vsub.s32 1, %v508
      %v510 = vrot.slane %v502, %v509
      %v511 = vlaneseq
      %v512 = vshrl.u32 %v511, 7
      %v513 = vsub.s32 1, %v512
      %v514 = vrot.slane %v506, %v513
      %vm515 = vcmp.eq.s32.totalorder %v395, %v510
      %vm516 = vcmp.eq.s32.totalorder %v395, %v514
      %vm517 = vcmp.eq.s32.totalorder %v396, %v510
      %vm518 = vcmp.eq.s32.totalorder %v396, %v514
      %v519 = vlaneseq
      %v520 = vshrl.u32 %v519, 7
      %v521 = vsub.s32 1, %v520
      %v522 = vrot.slane %v427, %v521
      %v523 = vlaneseq
      %v524 = vshrl.u32 %v523, 7
      %v525 = vsub.s32 3, %v524
      %v526 = vrot.slane %v427, %v525
      %v529 = vlaneseq
      %v530 = vshrl.u32 %v529, 7
      %v531 = vsub.s32 1, %v530
      %v532 = vrot.slane %v522, %v531
      %v533 = vlaneseq
      %v534 = vshrl.u32 %v533, 7
      %v535 = vsub.s32 1, %v534
      %v536 = vrot.slane %v526, %v535
      %v537 = vsel %vm515, %v532, 0.0
      %v538 = vsel %vm516, %v536, 0.0
      %v539 = vsel %vm517, %v532, 0.0
      %v540 = vsel %vm518, %v536, 0.0
      %v541 = vlaneseq
      %v542 = vshrl.u32 %v541, 7
      %v543 = vsub.s32 1, %v542
      %v544 = vrot.slane %v406, %v543
      %v545 = vlaneseq
      %v546 = vshrl.u32 %v545, 7
      %v547 = vsub.s32 3, %v546
      %v548 = vrot.slane %v406, %v547
      %v549 = vlaneseq
      %v550 = vshrl.u32 %v549, 7
      %v551 = vsub.s32 1, %v550
      %v552 = vrot.slane %v544, %v551
      %v553 = vlaneseq
      %v554 = vshrl.u32 %v553, 7
      %v555 = vsub.s32 1, %v554
      %v556 = vrot.slane %v548, %v555
      %vm557 = vcmp.eq.s32.totalorder %v395, %v552
      %vm558 = vcmp.eq.s32.totalorder %v395, %v556
      %vm559 = vcmp.eq.s32.totalorder %v396, %v552
      %vm560 = vcmp.eq.s32.totalorder %v396, %v556
      %v561 = vlaneseq
      %v562 = vshrl.u32 %v561, 7
      %v563 = vsub.s32 1, %v562
      %v564 = vrot.slane %v404, %v563
      %v565 = vlaneseq
      %v566 = vshrl.u32 %v565, 7
      %v567 = vsub.s32 3, %v566
      %v568 = vrot.slane %v404, %v567
      %v571 = vlaneseq
      %v572 = vshrl.u32 %v571, 7
      %v573 = vsub.s32 1, %v572
      %v574 = vrot.slane %v564, %v573
      %v575 = vlaneseq
      %v576 = vshrl.u32 %v575, 7
      %v577 = vsub.s32 1, %v576
      %v578 = vrot.slane %v568, %v577
      %v579 = vsel %vm557, %v574, 0.0
      %v580 = vsel %vm558, %v578, 0.0
      %v581 = vsel %vm559, %v574, 0.0
      %v582 = vsel %vm560, %v578, 0.0
      %v583 = vadd.f32 %v537, %v579
      %v584 = vadd.f32 %v538, %v580
      %v585 = vadd.f32 %v539, %v581
      %v586 = vadd.f32 %v540, %v582
      %v587 = vmul.f32 %v498, 0.5
      %v589 = vlaneseq
      %v590 = vshrl.u32 %v589, 7
      %v591 = vsub.s32 0, %v590
      %v592 = vrot.slane %v587, %v591
      %v593 = vlaneseq
      %v594 = vshrl.u32 %v593, 7
      %v595 = vsub.s32 1, %v594
      %v596 = vrot.slane %v587, %v595
      %v599 = vmul.f32 %v583, %v592
      %v600 = vmul.f32 %v584, %v596
      %v601 = vmul.f32 %v585, %v592
      %v602 = vmul.f32 %v586, %v596
      %v603 = vld [vmem:[%s359] sm:$0xff]
      %v604 = vld [vmem:[%s359 + $0x8] sm:$0xff]
      %v605 = vld [vmem:[%s359 + $0x10] sm:$0xff]
      %v606 = vld [vmem:[%s359 + $0x18] sm:$0xff]
      %v607 = vld [vmem:[%s359 + $0x20] sm:$0xff]
      %v608 = vld [vmem:[%s359 + $0x28] sm:$0xff]
      %vm609 = vcmask 130048
      %v611 = vsel %vm609, %v603, 0
      %v614 = vsel %vm609, %v604, 0
      %v617 = vsel %vm609, %v605, 0
      %v620 = vsel %vm609, %v606, 0
      %v623 = vsel %vm609, %v607, 0
      %v626 = vsel %vm609, %v608, 0
      %628 = vmatprep.subr.mxu0 %v495
      %629 = vmatpush1.msra.mxu0 %v494
      %630 = vmatprep.subr.mxu0 %v497
      %631 = vmatpush1.msra.mxu0 %v496
      %632 = vmatprep.subr.mxu0 0.0
      %633 = vmatpush1.msra.mxu0 0.0
      %634 = vmatprep.subr.mxu0 0.0
      %635 = vmatpush1.msra.mxu0 0.0
      %636 = vmatprep.subr.mxu0 0.0
      %637 = vmatpush1.msra.mxu0 0.0
      %638 = vmatprep.subr.mxu0 0.0
      %639 = vmatpush1.msra.mxu0 0.0
      %640 = vmatprep.subr.mxu0 0.0
      %641 = vmatpush1.msra.mxu0 0.0
      %642 = vmatprep.subr.mxu0 0.0
      %643 = vmatpush1.msra.mxu0 0.0
      %644 = vmatprep.subr.mxu0 0.0
      %645 = vmatpush1.msra.mxu0 0.0
      %646 = vmatprep.subr.mxu0 0.0
      %647 = vmatpush1.msra.mxu0 0.0
      %648 = vmatprep.subr.mxu0 0.0
      %649 = vmatpush1.msra.mxu0 0.0
      %650 = vmatprep.subr.mxu0 0.0
      %651 = vmatpush1.msra.mxu0 0.0
      %652 = vmatprep.subr.mxu0 0.0
      %653 = vmatpush1.msra.mxu0 0.0
      %654 = vmatprep.subr.mxu0 0.0
      %655 = vmatpush1.msra.mxu0 0.0
      %656 = vmatprep.subr.mxu0 0.0
      %657 = vmatpush1.msra.mxu0 0.0
      %658 = vmatprep.subr.mxu0 0.0
      %659 = vmatpush1.msra.mxu0 0.0
      %660 = vmatprep.subr.mxu0 0.0
      %661 = vmatpush1.msra.mxu0 0.0
      %662 = vmatprep.subr.mxu0 0.0
      %663 = vmatpush1.msra.mxu0 0.0
      %664 = vmatprep.subr.mxu0 0.0
      %665 = vmatpush1.msra.mxu0 0.0
      %666 = vmatprep.subr.mxu0 0.0
      %667 = vmatpush1.msra.mxu0 0.0
      %668 = vmatprep.subr.mxu0 0.0
      %669 = vmatpush1.msra.mxu0 0.0
      %670 = vmatprep.subr.mxu0 0.0
      %671 = vmatpush1.msra.mxu0 0.0
      %672 = vmatprep.subr.mxu0 0.0
      %673 = vmatpush1.msra.mxu0 0.0
      %674 = vmatprep.subr.mxu0 0.0
      %675 = vmatpush1.msra.mxu0 0.0
      %676 = vmatprep.subr.mxu0 0.0
      %677 = vmatpush1.msra.mxu0 0.0
      %678 = vmatprep.subr.mxu0 0.0
      %679 = vmatpush1.msra.mxu0 0.0
      %680 = vmatprep.subr.mxu0 0.0
      %681 = vmatpush1.msra.mxu0 0.0
      %682 = vmatprep.subr.mxu0 0.0
      %683 = vmatpush1.msra.mxu0 0.0
      %684 = vmatprep.subr.mxu0 0.0
      %685 = vmatpush1.msra.mxu0 0.0
      %686 = vmatprep.subr.mxu0 0.0
      %687 = vmatpush1.msra.mxu0 0.0
      %688 = vmatprep.subr.mxu0 0.0
      %689 = vmatpush1.msra.mxu0 0.0
      %690 = vmatprep.subr.mxu0 0.0
      %691 = vmatpush1.msra.mxu0 0.0
      %692 = vmatprep.mubr.f32.mxu0 0.0
      %693 = vmatmul.mubr.f32.gmra.mrb[0].mxu0 %v611
      %v694 = vpop.f32.mrb[0].mxu0
      %v695 = vadd.f32 0.0, %v694
      %v696 = vpop.f32.mrb[0].mxu0
      %v697 = vadd.f32 0.0, %v696
      %698 = vmatprep.mubr.f32.mxu0 0.0
      %699 = vmatmul.mubr.f32.gmra.mrb[0].mxu0 %v614
      %v700 = vpop.f32.mrb[0].mxu0
      %v701 = vadd.f32 0.0, %v700
      %v702 = vpop.f32.mrb[0].mxu0
      %v703 = vadd.f32 0.0, %v702
      %704 = vmatprep.mubr.f32.mxu0 0.0
      %705 = vmatmul.mubr.f32.gmra.mrb[0].mxu0 %v617
      %v706 = vpop.f32.mrb[0].mxu0
      %v707 = vadd.f32 0.0, %v706
      %v708 = vpop.f32.mrb[0].mxu0
      %v709 = vadd.f32 0.0, %v708
      %710 = vmatprep.mubr.f32.mxu0 0.0
      %711 = vmatmul.mubr.f32.gmra.mrb[0].mxu0 %v620
      %v712 = vpop.f32.mrb[0].mxu0
      %v713 = vadd.f32 0.0, %v712
      %v714 = vpop.f32.mrb[0].mxu0
      %v715 = vadd.f32 0.0, %v714
      %716 = vmatprep.mubr.f32.mxu0 0.0
      %717 = vmatmul.mubr.f32.gmra.mrb[0].mxu0 %v623
      %v718 = vpop.f32.mrb[0].mxu0
      %v719 = vadd.f32 0.0, %v718
      %v720 = vpop.f32.mrb[0].mxu0
      %v721 = vadd.f32 0.0, %v720
      %722 = vmatprep.mubr.f32.mxu0 0.0
      %723 = vmatmul.mubr.f32.gmra.mrb[0].mxu0 %v626
      %v724 = vpop.f32.mrb[0].mxu0
      %v725 = vadd.f32 0.0, %v724
      %v726 = vpop.f32.mrb[0].mxu0
      %v727 = vadd.f32 0.0, %v726
      %728 = vdwg.mxu0
      %v729 = vmul.f32 %v695, %v599
      %v730 = vmul.f32 %v697, %v600
      %v731 = vmul.f32 %v701, %v601
      %v732 = vmul.f32 %v703, %v602
      %v733 = vadd.f32 %v729, %v731
      %v734 = vrot.slane %v733, 4
      %v735 = vadd.f32 %v733, %v734
      %v736 = vrot.slane %v735, 2
      %v737 = vadd.f32 %v735, %v736
      %v738 = vrot.slane %v737, 1
      %v739 = vadd.f32 %v737, %v738
      %v740 = vadd.f32 %v730, %v732
      %v741 = vrot.slane %v740, 4
      %v742 = vadd.f32 %v740, %v741
      %v743 = vrot.slane %v742, 2
      %v744 = vadd.f32 %v742, %v743
      %v745 = vrot.slane %v744, 1
      %v746 = vadd.f32 %v744, %v745
      %v747 = vmul.f32 %v707, %v599
      %v748 = vmul.f32 %v709, %v600
      %v749 = vmul.f32 %v713, %v601
      %v750 = vmul.f32 %v715, %v602
      %v751 = vadd.f32 %v747, %v749
      %v752 = vrot.slane %v751, 4
      %v753 = vadd.f32 %v751, %v752
      %v754 = vrot.slane %v753, 2
      %v755 = vadd.f32 %v753, %v754
      %v756 = vrot.slane %v755, 1
      %v757 = vadd.f32 %v755, %v756
      %v758 = vadd.f32 %v748, %v750
      %v759 = vrot.slane %v758, 4
      %v760 = vadd.f32 %v758, %v759
      %v761 = vrot.slane %v760, 2
      %v762 = vadd.f32 %v760, %v761
      %v763 = vrot.slane %v762, 1
      %v764 = vadd.f32 %v762, %v763
      %v765 = vmul.f32 %v719, %v599
      %v766 = vmul.f32 %v721, %v600
      %v767 = vmul.f32 %v725, %v601
      %v768 = vmul.f32 %v727, %v602
      %v769 = vadd.f32 %v765, %v767
      %v770 = vrot.slane %v769, 4
      %v771 = vadd.f32 %v769, %v770
      %v772 = vrot.slane %v771, 2
      %v773 = vadd.f32 %v771, %v772
      %v774 = vrot.slane %v773, 1
      %v775 = vadd.f32 %v773, %v774
      %v776 = vadd.f32 %v766, %v768
      %v777 = vrot.slane %v776, 4
      %v778 = vadd.f32 %v776, %v777
      %v779 = vrot.slane %v778, 2
      %v780 = vadd.f32 %v778, %v779
      %v781 = vrot.slane %v780, 1
      %v782 = vadd.f32 %v780, %v781
      %vm783 = vcmask 1040384
      %v784 = vsel %vm783, %v739, %v757
      %v785 = vsel %vm783, %v746, %v764
      %vm786 = vcmask 1041408
      %v787 = vsel %vm786, %v784, %v775
      %v788 = vsel %vm786, %v785, %v782
      %v789 = vld [vmem:[%s378] sm:$0xf]
      %v790 = vadd.f32 %v393, %v789
      %v791 = vmax.f32 %v790, 0.0
      %v792 = vmin.f32 %v791, 15.0
      %v793 = vfloor.f32 %v792
      %v794 = vadd.f32 %v793, 1.0
      %v795 = vmin.f32 %v794, 15.0
      %v796 = vsub.f32 %v792, %v793
      %v797 = vcvt.f32.s32.to.zero.pseudo %v793
      %v798 = vcvt.f32.s32.to.zero.pseudo %v795
      %v799 = vlaneseq
      %v800 = vshrl.u32 %v799, 7
      %v801 = vsub.s32 0, %v800
      %v802 = vrot.slane %v797, %v801
      %v803 = vlaneseq
      %v804 = vshrl.u32 %v803, 7
      %v805 = vsub.s32 2, %v804
      %v806 = vrot.slane %v797, %v805
      %v807 = vlaneseq
      %v808 = vshrl.u32 %v807, 7
      %v809 = vsub.s32 0, %v808
      %v810 = vrot.slane %v802, %v809
      %v811 = vlaneseq
      %v812 = vshrl.u32 %v811, 7
      %v813 = vsub.s32 0, %v812
      %v814 = vrot.slane %v806, %v813
      %vm815 = vcmp.eq.s32.totalorder %v395, %v810
      %vm816 = vcmp.eq.s32.totalorder %v395, %v814
      %vm817 = vcmp.eq.s32.totalorder %v396, %v810
      %vm818 = vcmp.eq.s32.totalorder %v396, %v814
      %v819 = vsub.f32 1.0, %v796
      %v821 = vlaneseq
      %v822 = vshrl.u32 %v821, 7
      %v823 = vsub.s32 0, %v822
      %v824 = vrot.slane %v819, %v823
      %v825 = vlaneseq
      %v826 = vshrl.u32 %v825, 7
      %v827 = vsub.s32 2, %v826
      %v828 = vrot.slane %v819, %v827
      %v831 = vlaneseq
      %v832 = vshrl.u32 %v831, 7
      %v833 = vsub.s32 0, %v832
      %v834 = vrot.slane %v824, %v833
      %v835 = vlaneseq
      %v836 = vshrl.u32 %v835, 7
      %v837 = vsub.s32 0, %v836
      %v838 = vrot.slane %v828, %v837
      %v839 = vsel %vm815, %v834, 0.0
      %v840 = vsel %vm816, %v838, 0.0
      %v841 = vsel %vm817, %v834, 0.0
      %v842 = vsel %vm818, %v838, 0.0
      %v843 = vlaneseq
      %v844 = vshrl.u32 %v843, 7
      %v845 = vsub.s32 0, %v844
      %v846 = vrot.slane %v798, %v845
      %v847 = vlaneseq
      %v848 = vshrl.u32 %v847, 7
      %v849 = vsub.s32 2, %v848
      %v850 = vrot.slane %v798, %v849
      %v851 = vlaneseq
      %v852 = vshrl.u32 %v851, 7
      %v853 = vsub.s32 0, %v852
      %v854 = vrot.slane %v846, %v853
      %v855 = vlaneseq
      %v856 = vshrl.u32 %v855, 7
      %v857 = vsub.s32 0, %v856
      %v858 = vrot.slane %v850, %v857
      %vm859 = vcmp.eq.s32.totalorder %v395, %v854
      %vm860 = vcmp.eq.s32.totalorder %v395, %v858
      %vm861 = vcmp.eq.s32.totalorder %v396, %v854
      %vm862 = vcmp.eq.s32.totalorder %v396, %v858
      %v864 = vlaneseq
      %v865 = vshrl.u32 %v864, 7
      %v866 = vsub.s32 0, %v865
      %v867 = vrot.slane %v796, %v866
      %v868 = vlaneseq
      %v869 = vshrl.u32 %v868, 7
      %v870 = vsub.s32 2, %v869
      %v871 = vrot.slane %v796, %v870
      %v874 = vlaneseq
      %v875 = vshrl.u32 %v874, 7
      %v876 = vsub.s32 0, %v875
      %v877 = vrot.slane %v867, %v876
      %v878 = vlaneseq
      %v879 = vshrl.u32 %v878, 7
      %v880 = vsub.s32 0, %v879
      %v881 = vrot.slane %v871, %v880
      %v882 = vsel %vm859, %v877, 0.0
      %v883 = vsel %vm860, %v881, 0.0
      %v884 = vsel %vm861, %v877, 0.0
      %v885 = vsel %vm862, %v881, 0.0
      %v886 = vadd.f32 %v839, %v882
      %v887 = vadd.f32 %v840, %v883
      %v888 = vadd.f32 %v841, %v884
      %v889 = vadd.f32 %v842, %v885
      %v890 = vld [vmem:[%s382] sm:$0x3]
      %v891 = vlaneseq
      %v892 = vshrl.u32 %v891, 7
      %v893 = vsub.s32 1, %v892
      %v894 = vrot.slane %v797, %v893
      %v895 = vlaneseq
      %v896 = vshrl.u32 %v895, 7
      %v897 = vsub.s32 3, %v896
      %v898 = vrot.slane %v797, %v897
      %v899 = vlaneseq
      %v900 = vshrl.u32 %v899, 7
      %v901 = vsub.s32 1, %v900
      %v902 = vrot.slane %v894, %v901
      %v903 = vlaneseq
      %v904 = vshrl.u32 %v903, 7
      %v905 = vsub.s32 1, %v904
      %v906 = vrot.slane %v898, %v905
      %vm907 = vcmp.eq.s32.totalorder %v395, %v902
      %vm908 = vcmp.eq.s32.totalorder %v395, %v906
      %vm909 = vcmp.eq.s32.totalorder %v396, %v902
      %vm910 = vcmp.eq.s32.totalorder %v396, %v906
      %v911 = vlaneseq
      %v912 = vshrl.u32 %v911, 7
      %v913 = vsub.s32 1, %v912
      %v914 = vrot.slane %v819, %v913
      %v915 = vlaneseq
      %v916 = vshrl.u32 %v915, 7
      %v917 = vsub.s32 3, %v916
      %v918 = vrot.slane %v819, %v917
      %v921 = vlaneseq
      %v922 = vshrl.u32 %v921, 7
      %v923 = vsub.s32 1, %v922
      %v924 = vrot.slane %v914, %v923
      %v925 = vlaneseq
      %v926 = vshrl.u32 %v925, 7
      %v927 = vsub.s32 1, %v926
      %v928 = vrot.slane %v918, %v927
      %v929 = vsel %vm907, %v924, 0.0
      %v930 = vsel %vm908, %v928, 0.0
      %v931 = vsel %vm909, %v924, 0.0
      %v932 = vsel %vm910, %v928, 0.0
      %v933 = vlaneseq
      %v934 = vshrl.u32 %v933, 7
      %v935 = vsub.s32 1, %v934
      %v936 = vrot.slane %v798, %v935
      %v937 = vlaneseq
      %v938 = vshrl.u32 %v937, 7
      %v939 = vsub.s32 3, %v938
      %v940 = vrot.slane %v798, %v939
      %v941 = vlaneseq
      %v942 = vshrl.u32 %v941, 7
      %v943 = vsub.s32 1, %v942
      %v944 = vrot.slane %v936, %v943
      %v945 = vlaneseq
      %v946 = vshrl.u32 %v945, 7
      %v947 = vsub.s32 1, %v946
      %v948 = vrot.slane %v940, %v947
      %vm949 = vcmp.eq.s32.totalorder %v395, %v944
      %vm950 = vcmp.eq.s32.totalorder %v395, %v948
      %vm951 = vcmp.eq.s32.totalorder %v396, %v944
      %vm952 = vcmp.eq.s32.totalorder %v396, %v948
      %v953 = vlaneseq
      %v954 = vshrl.u32 %v953, 7
      %v955 = vsub.s32 1, %v954
      %v956 = vrot.slane %v796, %v955
      %v957 = vlaneseq
      %v958 = vshrl.u32 %v957, 7
      %v959 = vsub.s32 3, %v958
      %v960 = vrot.slane %v796, %v959
      %v963 = vlaneseq
      %v964 = vshrl.u32 %v963, 7
      %v965 = vsub.s32 1, %v964
      %v966 = vrot.slane %v956, %v965
      %v967 = vlaneseq
      %v968 = vshrl.u32 %v967, 7
      %v969 = vsub.s32 1, %v968
      %v970 = vrot.slane %v960, %v969
      %v971 = vsel %vm949, %v966, 0.0
      %v972 = vsel %vm950, %v970, 0.0
      %v973 = vsel %vm951, %v966, 0.0
      %v974 = vsel %vm952, %v970, 0.0
      %v975 = vadd.f32 %v929, %v971
      %v976 = vadd.f32 %v930, %v972
      %v977 = vadd.f32 %v931, %v973
      %v978 = vadd.f32 %v932, %v974
      %v979 = vmul.f32 %v890, 0.5
      %v981 = vlaneseq
      %v982 = vshrl.u32 %v981, 7
      %v983 = vsub.s32 0, %v982
      %v984 = vrot.slane %v979, %v983
      %v985 = vlaneseq
      %v986 = vshrl.u32 %v985, 7
      %v987 = vsub.s32 1, %v986
      %v988 = vrot.slane %v979, %v987
      %v991 = vmul.f32 %v975, %v984
      %v992 = vmul.f32 %v976, %v988
      %v993 = vmul.f32 %v977, %v984
      %v994 = vmul.f32 %v978, %v988
      %v995 = vld [vmem:[%s373] sm:$0xff]
      %v996 = vld [vmem:[%s373 + $0x8] sm:$0xff]
      %v997 = vld [vmem:[%s373 + $0x10] sm:$0xff]
      %v998 = vld [vmem:[%s373 + $0x18] sm:$0xff]
      %v999 = vld [vmem:[%s373 + $0x20] sm:$0xff]
      %v1000 = vld [vmem:[%s373 + $0x28] sm:$0xff]
      %v1002 = vsel %vm609, %v995, 0
      %v1005 = vsel %vm609, %v996, 0
      %v1008 = vsel %vm609, %v997, 0
      %v1011 = vsel %vm609, %v998, 0
      %v1014 = vsel %vm609, %v999, 0
      %v1017 = vsel %vm609, %v1000, 0
      %1019 = vmatprep.subr.mxu0 %v887
      %1020 = vmatpush1.msra.mxu0 %v886
      %1021 = vmatprep.subr.mxu0 %v889
      %1022 = vmatpush1.msra.mxu0 %v888
      %1023 = vmatprep.subr.mxu0 0.0
      %1024 = vmatpush1.msra.mxu0 0.0
      %1025 = vmatprep.subr.mxu0 0.0
      %1026 = vmatpush1.msra.mxu0 0.0
      %1027 = vmatprep.subr.mxu0 0.0
      %1028 = vmatpush1.msra.mxu0 0.0
      %1029 = vmatprep.subr.mxu0 0.0
      %1030 = vmatpush1.msra.mxu0 0.0
      %1031 = vmatprep.subr.mxu0 0.0
      %1032 = vmatpush1.msra.mxu0 0.0
      %1033 = vmatprep.subr.mxu0 0.0
      %1034 = vmatpush1.msra.mxu0 0.0
      %1035 = vmatprep.subr.mxu0 0.0
      %1036 = vmatpush1.msra.mxu0 0.0
      %1037 = vmatprep.subr.mxu0 0.0
      %1038 = vmatpush1.msra.mxu0 0.0
      %1039 = vmatprep.subr.mxu0 0.0
      %1040 = vmatpush1.msra.mxu0 0.0
      %1041 = vmatprep.subr.mxu0 0.0
      %1042 = vmatpush1.msra.mxu0 0.0
      %1043 = vmatprep.subr.mxu0 0.0
      %1044 = vmatpush1.msra.mxu0 0.0
      %1045 = vmatprep.subr.mxu0 0.0
      %1046 = vmatpush1.msra.mxu0 0.0
      %1047 = vmatprep.subr.mxu0 0.0
      %1048 = vmatpush1.msra.mxu0 0.0
      %1049 = vmatprep.subr.mxu0 0.0
      %1050 = vmatpush1.msra.mxu0 0.0
      %1051 = vmatprep.subr.mxu0 0.0
      %1052 = vmatpush1.msra.mxu0 0.0
      %1053 = vmatprep.subr.mxu0 0.0
      %1054 = vmatpush1.msra.mxu0 0.0
      %1055 = vmatprep.subr.mxu0 0.0
      %1056 = vmatpush1.msra.mxu0 0.0
      %1057 = vmatprep.subr.mxu0 0.0
      %1058 = vmatpush1.msra.mxu0 0.0
      %1059 = vmatprep.subr.mxu0 0.0
      %1060 = vmatpush1.msra.mxu0 0.0
      %1061 = vmatprep.subr.mxu0 0.0
      %1062 = vmatpush1.msra.mxu0 0.0
      %1063 = vmatprep.subr.mxu0 0.0
      %1064 = vmatpush1.msra.mxu0 0.0
      %1065 = vmatprep.subr.mxu0 0.0
      %1066 = vmatpush1.msra.mxu0 0.0
      %1067 = vmatprep.subr.mxu0 0.0
      %1068 = vmatpush1.msra.mxu0 0.0
      %1069 = vmatprep.subr.mxu0 0.0
      %1070 = vmatpush1.msra.mxu0 0.0
      %1071 = vmatprep.subr.mxu0 0.0
      %1072 = vmatpush1.msra.mxu0 0.0
      %1073 = vmatprep.subr.mxu0 0.0
      %1074 = vmatpush1.msra.mxu0 0.0
      %1075 = vmatprep.subr.mxu0 0.0
      %1076 = vmatpush1.msra.mxu0 0.0
      %1077 = vmatprep.subr.mxu0 0.0
      %1078 = vmatpush1.msra.mxu0 0.0
      %1079 = vmatprep.subr.mxu0 0.0
      %1080 = vmatpush1.msra.mxu0 0.0
      %1081 = vmatprep.subr.mxu0 0.0
      %1082 = vmatpush1.msra.mxu0 0.0
      %1083 = vmatprep.mubr.f32.mxu0 0.0
      %1084 = vmatmul.mubr.f32.gmra.mrb[0].mxu0 %v1002
      %v1085 = vpop.f32.mrb[0].mxu0
      %v1086 = vadd.f32 0.0, %v1085
      %v1087 = vpop.f32.mrb[0].mxu0
      %v1088 = vadd.f32 0.0, %v1087
      %1089 = vmatprep.mubr.f32.mxu0 0.0
      %1090 = vmatmul.mubr.f32.gmra.mrb[0].mxu0 %v1005
      %v1091 = vpop.f32.mrb[0].mxu0
      %v1092 = vadd.f32 0.0, %v1091
      %v1093 = vpop.f32.mrb[0].mxu0
      %v1094 = vadd.f32 0.0, %v1093
      %1095 = vmatprep.mubr.f32.mxu0 0.0
      %1096 = vmatmul.mubr.f32.gmra.mrb[0].mxu0 %v1008
      %v1097 = vpop.f32.mrb[0].mxu0
      %v1098 = vadd.f32 0.0, %v1097
      %v1099 = vpop.f32.mrb[0].mxu0
      %v1100 = vadd.f32 0.0, %v1099
      %1101 = vmatprep.mubr.f32.mxu0 0.0
      %1102 = vmatmul.mubr.f32.gmra.mrb[0].mxu0 %v1011
      %v1103 = vpop.f32.mrb[0].mxu0
      %v1104 = vadd.f32 0.0, %v1103
      %v1105 = vpop.f32.mrb[0].mxu0
      %v1106 = vadd.f32 0.0, %v1105
      %1107 = vmatprep.mubr.f32.mxu0 0.0
      %1108 = vmatmul.mubr.f32.gmra.mrb[0].mxu0 %v1014
      %v1109 = vpop.f32.mrb[0].mxu0
      %v1110 = vadd.f32 0.0, %v1109
      %v1111 = vpop.f32.mrb[0].mxu0
      %v1112 = vadd.f32 0.0, %v1111
      %1113 = vmatprep.mubr.f32.mxu0 0.0
      %1114 = vmatmul.mubr.f32.gmra.mrb[0].mxu0 %v1017
      %v1115 = vpop.f32.mrb[0].mxu0
      %v1116 = vadd.f32 0.0, %v1115
      %v1117 = vpop.f32.mrb[0].mxu0
      %v1118 = vadd.f32 0.0, %v1117
      %1119 = vdwg.mxu0
      %v1120 = vmul.f32 %v1086, %v991
      %v1121 = vmul.f32 %v1088, %v992
      %v1122 = vmul.f32 %v1092, %v993
      %v1123 = vmul.f32 %v1094, %v994
      %v1124 = vadd.f32 %v1120, %v1122
      %v1125 = vrot.slane %v1124, 4
      %v1126 = vadd.f32 %v1124, %v1125
      %v1127 = vrot.slane %v1126, 2
      %v1128 = vadd.f32 %v1126, %v1127
      %v1129 = vrot.slane %v1128, 1
      %v1130 = vadd.f32 %v1128, %v1129
      %v1131 = vadd.f32 %v1121, %v1123
      %v1132 = vrot.slane %v1131, 4
      %v1133 = vadd.f32 %v1131, %v1132
      %v1134 = vrot.slane %v1133, 2
      %v1135 = vadd.f32 %v1133, %v1134
      %v1136 = vrot.slane %v1135, 1
      %v1137 = vadd.f32 %v1135, %v1136
      %v1138 = vmul.f32 %v1098, %v991
      %v1139 = vmul.f32 %v1100, %v992
      %v1140 = vmul.f32 %v1104, %v993
      %v1141 = vmul.f32 %v1106, %v994
      %v1142 = vadd.f32 %v1138, %v1140
      %v1143 = vrot.slane %v1142, 4
      %v1144 = vadd.f32 %v1142, %v1143
      %v1145 = vrot.slane %v1144, 2
      %v1146 = vadd.f32 %v1144, %v1145
      %v1147 = vrot.slane %v1146, 1
      %v1148 = vadd.f32 %v1146, %v1147
      %v1149 = vadd.f32 %v1139, %v1141
      %v1150 = vrot.slane %v1149, 4
      %v1151 = vadd.f32 %v1149, %v1150
      %v1152 = vrot.slane %v1151, 2
      %v1153 = vadd.f32 %v1151, %v1152
      %v1154 = vrot.slane %v1153, 1
      %v1155 = vadd.f32 %v1153, %v1154
      %v1156 = vmul.f32 %v1110, %v991
      %v1157 = vmul.f32 %v1112, %v992
      %v1158 = vmul.f32 %v1116, %v993
      %v1159 = vmul.f32 %v1118, %v994
      %v1160 = vadd.f32 %v1156, %v1158
      %v1161 = vrot.slane %v1160, 4
      %v1162 = vadd.f32 %v1160, %v1161
      %v1163 = vrot.slane %v1162, 2
      %v1164 = vadd.f32 %v1162, %v1163
      %v1165 = vrot.slane %v1164, 1
      %v1166 = vadd.f32 %v1164, %v1165
      %v1167 = vadd.f32 %v1157, %v1159
      %v1168 = vrot.slane %v1167, 4
      %v1169 = vadd.f32 %v1167, %v1168
      %v1170 = vrot.slane %v1169, 2
      %v1171 = vadd.f32 %v1169, %v1170
      %v1172 = vrot.slane %v1171, 1
      %v1173 = vadd.f32 %v1171, %v1172
      %v1174 = vsel %vm783, %v1130, %v1148
      %v1175 = vsel %vm783, %v1137, %v1155
      %v1176 = vsel %vm786, %v1174, %v1166
      %v1177 = vsel %vm786, %v1175, %v1173
      %v1178 = vadd.f32 %v787, %v1176
      %v1179 = vadd.f32 %v788, %v1177
      %v1182 = vcombine.low %v1178, %v1179
      %1184 = vst [vmem:[%s392] sm:$0x77] %v1182
      %p1185 = scmp.lt.s32.totalorder %s18, 1
      %s1186 = scalar_select %p1185, %s18, 1
      %s1187 = smul.addr %s1186, 2
      %s1188 = smul.addr %s1187, 4
      %s1189 = scalar_lea.vmem %s7, %s1188
      // Predicated region
      $region49: #{tpu_custom_call.1} parent=47 // pred_check
        %p1190 = pneg %p218
      $region50: #{tpu_custom_call.1} parent=47 // pred_check_branch
        %1192 = sbr.rel (%p1190) target = $region52
      $region51: #{tpu_custom_call.1} parent=47 // pred_region
        _
      $region52: #{tpu_custom_call.1} parent=47 // pred_fallthru
        _
    $region48: #{tpu_custom_call.1} parent=5 // pred_fallthru
      _
    %p1193 = scmp.le.s32.totalorder 2, %s13
    // Predicated region
    $region53: #{tpu_custom_call.1} parent=5 // pred_check
      %p1194 = pneg %p1193
    $region54: #{tpu_custom_call.1} parent=5 // pred_check_branch
      %1196 = sbr.rel (%p1194) target = $region56
    $region55: #{tpu_custom_call.1} parent=5 // pred_region
      %s1197 = ssub.s32 %s13, 2
      // Predicated region
      $region57: #{tpu_custom_call.1} parent=55 // pred_check
        %p1198 = pneg %p224
      $region58: #{tpu_custom_call.1} parent=55 // pred_check_branch
        %1200 = sbr.rel (%p1198) target = $region60
      $region59: #{tpu_custom_call.1} parent=55 // pred_region
        %p1201 = scmp.lt.s32.totalorder %s19, 1
        %s1202 = scalar_select %p1201, %s19, 1
        %s1203 = smul.addr %s1202, 2
        %s1204 = smul.addr %s1203, 4
        %s1205 = scalar_lea.vmem %s7, %s1204
      $region60: #{tpu_custom_call.1} parent=55 // pred_fallthru
        _
    $region56: #{tpu_custom_call.1} parent=5 // pred_fallthru
      _
  $region6: #{tpu_custom_call.1} parent=0 // loop_footer
    %s17 = sadd.s32 1, %s13
  $region7: #{tpu_custom_call.1} parent=0 // loop_footer_branch
    %12 = sbr.rel target = $region3
  $region8: #{tpu_custom_call.1} parent=0 // loop_exit
    _

</llo_original>
